<compile_context>
chip_gen: v5e
topology: v5e:2x2
jax: 0.10.0
libtpu: 0.0.40
codegen_flags: <defaults>
</compile_context>

<pallas_src>
import functools

import jax
import jax.numpy as jnp
from jax.experimental import pallas as pl
from jax.experimental.pallas import tpu as pltpu

LRELU_SLOPE = 0.2
BN_EPS = 1e-5
KSIZE = 4
PAD = 1
LANE = 128


def _round_up(x, m):
    return ((x + m - 1) // m) * m


def _vmem_config():
    """(vmem_limit_bytes, row_tile_cap) chosen per TPU generation."""
    try:
        cap = pltpu.get_tpu_info().vmem_capacity_bytes
    except Exception:  # fall back conservatively if the query is unavailable
        cap = 128 * 1024 * 1024
    if cap >= 100 * 1024 * 1024:        # v5e / v6e class: 128 MiB physical VMEM
        return 64 * 1024 * 1024, 512
    return 32 * 1024 * 1024, 256        # v7x class: 64 MiB physical VMEM


def _pick_row_tile(rows, kdim, cp, in_affine, vmem_limit, row_cap):
    """Largest row tile (multiple of 16) whose footprint fits the VMEM budget."""
    per_row = kdim * 4 + cp * 12              # bf16 patches x2 buf + f32 result/out
    if in_affine:
        per_row += kdim * 6                   # f32 affine temp + bf16 recast
    fixed = kdim * cp * 4 + (2 << 20)         # resident bf16 weights (x2) + slack
    avail = max(vmem_limit - fixed, per_row * 16)
    tr = min(row_cap, avail // per_row, _round_up(rows, 16))
    return max(16, (int(tr) // 16) * 16)


def _pad_rows(p, tr, pad_row=None):
    """Pad patch rows up to a multiple of tr (with zeros or a given row value)."""
    rows, kdim = p.shape
    rows_pad = _round_up(rows, tr)
    if rows_pad != rows:
        extra = rows_pad - rows
        if pad_row is None:
            p = jnp.pad(p, ((0, extra), (0, 0)))
        else:
            fill = jnp.broadcast_to(pad_row.astype(p.dtype)[None, :], (extra, kdim))
            p = jnp.concatenate([p, fill], axis=0)
    return p, rows_pad


# ------------------------------ Pallas kernel ------------------------------ #
def _conv_kernel(*refs, in_affine, out_bias, out_act, stats):
    """Unified conv-layer kernel.

    refs (in order): patches (TR,K) bf16, weights (K,Cp) bf16,
                     [in_scale (1,K) f32, in_shift (1,K) f32]   if in_affine,
                     [bias (1,Cp) f32]                          if out_bias,
                     out (TR,Cp),
                     [part_sum (8,Cp) f32, part_sumsq (8,Cp) f32] if stats.
    """
    it = iter(refs)
    p_ref = next(it)
    w_ref = next(it)
    insc_ref = next(it) if in_affine else None
    insh_ref = next(it) if in_affine else None
    b_ref = next(it) if out_bias else None
    o_ref = next(it)
    sum_ref = next(it) if stats else None
    sq_ref = next(it) if stats else None

    p = p_ref[...]
    if in_affine:
        # Deferred BatchNorm affine + LeakyReLU(0.2) of the PREVIOUS layer,
        # applied per input channel (tiled 16x along K), in f32, then cast
        # back to bf16 for the MXU.  Hides under the matmul's MXU slots.
        pf = p.astype(jnp.float32) * insc_ref[...] + insh_ref[...]
        pf = jnp.where(pf > 0, pf, LRELU_SLOPE * pf)
        p = pf.astype(jnp.bfloat16)

    y = jnp.dot(p, w_ref[...], preferred_element_type=jnp.float32)
    if out_bias:
        y = y + b_ref[...]
    if out_act:
        y = jnp.where(y > 0, y, LRELU_SLOPE * y)
    o_ref[...] = y.astype(o_ref.dtype)

    if stats:
        # Per-tile partial BN statistics (row axis stays "parallel"); padded
        # rows/channels contribute exactly zero by construction.
        s = jnp.sum(y, axis=0, keepdims=True)
        q = jnp.sum(y * y, axis=0, keepdims=True)
        sum_ref[...] = jnp.broadcast_to(s, sum_ref.shape)
        sq_ref[...] = jnp.broadcast_to(q, sq_ref.shape)


# ------------------------------ layer wrapper ------------------------------ #
def conv_layer(patches, w_mat, *, bias=None, in_scale=None, in_shift=None,
               pad_row=None, stats=False, out_act=False,
               out_dtype=jnp.bfloat16, vmem_limit=32 * 1024 * 1024, row_cap=256):
    rows, kdim = patches.shape
    cp = w_mat.shape[1]
    in_affine = in_scale is not None
    tr = _pick_row_tile(rows, kdim, cp, in_affine, vmem_limit, row_cap)
    patches, rows_pad = _pad_rows(patches, tr, pad_row)
    ntiles = rows_pad // tr

    in_specs = [
        pl.BlockSpec((tr, kdim), lambda i: (i, 0)),       # streamed patches
        pl.BlockSpec((kdim, cp), lambda i: (0, 0)),       # resident weights
    ]
    args = [patches, w_mat]
    if in_affine:
        in_specs += [pl.BlockSpec((1, kdim), lambda i: (0, 0)),
                     pl.BlockSpec((1, kdim), lambda i: (0, 0))]
        args += [in_scale, in_shift]
    if bias is not None:
        in_specs.append(pl.BlockSpec((1, cp), lambda i: (0, 0)))
        args.append(bias)

    o_shape = jax.ShapeDtypeStruct((rows_pad, cp), out_dtype)
    o_spec = pl.BlockSpec((tr, cp), lambda i: (i, 0))
    if stats:
        s_shape = jax.ShapeDtypeStruct((ntiles * 8, cp), jnp.float32)
        s_spec = pl.BlockSpec((8, cp), lambda i: (i, 0))
        out_shape = (o_shape, s_shape, s_shape)
        out_specs = (o_spec, s_spec, s_spec)
    else:
        out_shape = o_shape
        out_specs = o_spec

    kernel = functools.partial(_conv_kernel, in_affine=in_affine,
                               out_bias=bias is not None, out_act=out_act,
                               stats=stats)
    res = pl.pallas_call(
        kernel,
        out_shape=out_shape,
        grid=(ntiles,),
        in_specs=in_specs,
        out_specs=out_specs,
        compiler_params=pltpu.CompilerParams(
            dimension_semantics=("parallel",),
            vmem_limit_bytes=vmem_limit),
    )(*args)

    if stats:
        y, psum, psq = res
        ssum = psum.reshape(ntiles, 8, cp)[:, 0, :].sum(axis=0)
        ssq = psq.reshape(ntiles, 8, cp)[:, 0, :].sum(axis=0)
        return y[:rows], ssum, ssq
    return res[:rows]


# -------------------------------- JAX glue ---------------------------------- #
def im2col(xp, k, s):
    """Patch extraction from an already spatially padded NHWC tensor."""
    B, Hp, Wp, C = xp.shape
    OH = (Hp - k) // s + 1
    OW = (Wp - k) // s + 1
    cols = []
    for kh in range(k):
        for kw in range(k):
            cols.append(xp[:, kh:kh + s * OH:s, kw:kw + s * OW:s, :])
    patches = jnp.stack(cols, axis=3)            # (B, OH, OW, k*k, C)
    return patches.reshape(B * OH * OW, k * k * C), (B, OH, OW)


def _bn_fold(ssum, ssq, gamma, beta, count):
    # Training-mode (batch-stat) BatchNorm folded to one per-channel affine.
    # NOTE: E[y^2]-E[y]^2 in f32 can lose precision when |mean| >> std; clamped.
    mean = ssum / count
    var = jnp.maximum(ssq / count - mean * mean, 0.0)
    scale = gamma * jax.lax.rsqrt(var + BN_EPS)
    shift = beta - mean * scale
    return scale, shift


def init_params(key, input_c, num_filters=64, n_down=3):
    """Deterministic params matching the PyTorch module, with channel padding
    baked into matmul-layout bf16 weights."""
    layer_defs = [(input_c, num_filters, 2, False, True)]
    for i in range(n_down):
        s = 1 if i == n_down - 1 else 2
        layer_defs.append(
            (num_filters * 2 ** i, num_filters * 2 ** (i + 1), s, True, True))
    layer_defs.append((num_filters * 2 ** n_down, 1, 1, False, False))

    params = []
    cin_pad = _round_up(input_c, 8)   # first-layer kdim = 16 * cin_pad (mult of 128)
    for (cin, cout, s, norm, act) in layer_defs:
        cout_pad = _round_up(cout, LANE)
        key, wk, bk = jax.random.split(key, 3)
        bound = float(1.0 / (cin * KSIZE * KSIZE) ** 0.5)
        w = jax.random.uniform(wk, (cout, cin, KSIZE, KSIZE), jnp.float32,
                               -bound, bound)
        w_k = jnp.transpose(w, (2, 3, 1, 0))                 # (kh, kw, cin, cout)
        w_full = jnp.zeros((KSIZE, KSIZE, cin_pad, cout_pad), jnp.float32)
        w_full = w_full.at[:, :, :cin, :cout].set(w_k)
        w_mat = w_full.reshape(KSIZE * KSIZE * cin_pad, cout_pad).astype(jnp.bfloat16)

        bias = jnp.zeros((1, cout_pad), jnp.float32)
        if not norm:                                         # Conv2d(bias=not norm)
            b = jax.random.uniform(bk, (cout,), jnp.float32, -bound, bound)
            bias = bias.at[0, :cout].set(b)
        gamma = jnp.zeros((cout_pad,), jnp.float32).at[:cout].set(1.0)
        beta = jnp.zeros((cout_pad,), jnp.float32)

        params.append(dict(w_mat=w_mat, bias=bias, gamma=gamma, beta=beta,
                           stride=s, norm=norm, act=act,
                           cin_pad=cin_pad, cout=cout, cout_pad=cout_pad))
        cin_pad = cout_pad
    return params


def patch_discriminator_forward(x_nchw, params):
    vmem_limit, row_cap = _vmem_config()

    x = jnp.transpose(x_nchw, (0, 2, 3, 1)).astype(jnp.bfloat16)   # NCHW -> NHWC
    cin = x.shape[-1]
    cin_pad = params[0]["cin_pad"]
    if cin_pad != cin:
        x = jnp.pad(x, ((0, 0), (0, 0), (0, 0), (0, cin_pad - cin)))

    pending = None   # deferred (scale, shift) of the previous BN layer, or None
    for li, layer in enumerate(params):
        B, H, W, Cp = x.shape
        if pending is None:
            xp = jnp.pad(x, ((0, 0), (PAD, PAD), (PAD, PAD), (0, 0)))
            in_scale = in_shift = pad_row = None
        else:
            scale, shift = pending
            # Pad the raw (pre-BN) tensor with the per-channel value that the
            # deferred affine maps to 0, so the border behaves like PyTorch's
            # zero padding of the activated tensor.  Padded channels: 0.
            safe = jnp.where(scale != 0, scale, 1.0)
            v = jnp.where(scale != 0, -shift / safe, 0.0)
            xp = (jnp.zeros((B, H + 2 * PAD, W + 2 * PAD, Cp), jnp.float32) + v
                  ).astype(x.dtype)
            xp = xp.at[:, PAD:-PAD, PAD:-PAD, :].set(x)
            in_scale = jnp.tile(scale, KSIZE * KSIZE)[None, :]   # (1, 16*Cp)
            in_shift = jnp.tile(shift, KSIZE * KSIZE)[None, :]
            pad_row = jnp.tile(v, KSIZE * KSIZE)                 # keeps BN stats exact

        patches, (B2, OH, OW) = im2col(xp, KSIZE, layer["stride"])
        rows = B2 * OH * OW
        is_last = li == len(params) - 1

        if layer["norm"]:
            y, ssum, ssq = conv_layer(
                patches, layer["w_mat"], in_scale=in_scale, in_shift=in_shift,
                pad_row=pad_row, stats=True, out_act=False,
                out_dtype=jnp.bfloat16, vmem_limit=vmem_limit, row_cap=row_cap)
            pending = _bn_fold(ssum, ssq, layer["gamma"], layer["beta"],
                               float(rows))
        else:
            y = conv_layer(
                patches, layer["w_mat"], bias=layer["bias"],
                in_scale=in_scale, in_shift=in_shift, pad_row=pad_row,
                stats=False, out_act=layer["act"],
                out_dtype=jnp.float32 if is_last else jnp.bfloat16,
                vmem_limit=vmem_limit, row_cap=row_cap)
            pending = None

        x = y.reshape(B2, OH, OW, layer["cout_pad"])

    out = x[..., :params[-1]["cout"]].astype(jnp.float32)
    return jnp.transpose(out, (0, 3, 1, 2))                 # NHWC -> NCHW


if __name__ == "__main__":
    key = jax.random.PRNGKey(0)
    kx, kp = jax.random.split(key)

    # 32x32 input so all 5 conv layers (strides 2,2,2,1,1, k=4, p=1) are valid.
    B, C, H, W = 2, 3, 32, 32
    x = jax.random.normal(kx, (B, C, H, W), jnp.float32)

    params = init_params(kp, input_c=C, num_filters=16, n_down=3)

    out = patch_discriminator_forward(x, params)
    out = jax.block_until_ready(out)

    # 32 -> 16 -> 8 -> 4 -> 3 -> 2 spatial; final channels = 1 (patch logits)
    assert out.shape == (B, 1, 2, 2), out.shape
    assert jnp.all(jnp.isfinite(out))
    print("KERNEL_OK")
</pallas_src>

<mosaic_0001>
module attributes {stable_mosaic.version = 11 : i64} {
  func.func @_conv_kernel(%arg0: i32, %arg1: memref<512x128xbf16, #tpu.memory_space<vmem>>, %arg2: memref<128x128xbf16, #tpu.memory_space<vmem>>, %arg3: memref<1x128xf32, #tpu.memory_space<vmem>>, %arg4: memref<512x128xbf16, #tpu.memory_space<vmem>>) attributes {dimension_semantics = [#tpu.dimension_semantics<parallel>], iteration_bounds = array<i64: 1>, scalar_prefetch = 0 : i64, scratch_operands = 0 : i64, tpu.core_type = #tpu.core_type<tc>, window_params = [{transform_indices = @transform_0, window_bounds = array<i64: 512, 128>}, {pipeline_mode = #tpu.pipeline_mode<synchronous>, transform_indices = @transform_1, window_bounds = array<i64: 128, 128>}, {pipeline_mode = #tpu.pipeline_mode<synchronous>, transform_indices = @transform_2, window_bounds = array<i64: 1, 128>}, {transform_indices = @transform_3, window_bounds = array<i64: 512, 128>}]} {
    %c0 = arith.constant 0 : index
    %c0_0 = arith.constant 0 : index
    %0 = vector.load %arg1[%c0, %c0_0] : memref<512x128xbf16, #tpu.memory_space<vmem>>, vector<512x128xbf16>
    %c0_1 = arith.constant 0 : index
    %c0_2 = arith.constant 0 : index
    %1 = vector.load %arg2[%c0_1, %c0_2] : memref<128x128xbf16, #tpu.memory_space<vmem>>, vector<128x128xbf16>
    %cst = arith.constant dense<0.000000e+00> : vector<512x128xf32>
    %2 = tpu.matmul %0, %1, %cst {dimension_numbers = #tpu.dot_dimension_numbers<[1], [0], [0], [1], [0, 0, 1, 1], [], []>} : vector<512x128xbf16>, vector<128x128xbf16>, vector<512x128xf32> -> vector<512x128xf32>
    %c0_3 = arith.constant 0 : index
    %c0_4 = arith.constant 0 : index
    %3 = vector.load %arg3[%c0_3, %c0_4] : memref<1x128xf32, #tpu.memory_space<vmem>>, vector<1x128xf32>
    %4 = vector.broadcast %3 : vector<1x128xf32> to vector<512x128xf32>
    %5 = arith.addf %2, %4 : vector<512x128xf32>
    %cst_5 = arith.constant 0.000000e+00 : f32
    %6 = vector.broadcast %cst_5 : f32 to vector<512x128xf32>
    %7 = arith.cmpf ogt, %5, %6 : vector<512x128xf32>
    %cst_6 = arith.constant 2.000000e-01 : f32
    %8 = vector.broadcast %cst_6 : f32 to vector<512x128xf32>
    %9 = arith.mulf %8, %5 : vector<512x128xf32>
    %10 = arith.select %7, %5, %9 : vector<512x128xi1>, vector<512x128xf32>
    %11 = arith.truncf %10 : vector<512x128xf32> to vector<512x128xbf16>
    %c0_7 = arith.constant 0 : index
    %c0_8 = arith.constant 0 : index
    %12 = vector.load %arg4[%c0_7, %c0_8] : memref<512x128xbf16, #tpu.memory_space<vmem>>, vector<512x128xbf16>
    tpu.vector_store %arg4[%c0_7, %c0_8], %11 {strides = array<i32>} : memref<512x128xbf16, #tpu.memory_space<vmem>>, vector<512x128xbf16>,
    return
  }
  func.func @transform_0(%arg0: i32) -> (i32, i32) {
    %c0_i32 = arith.constant 0 : i32
    %c0_i32_0 = arith.constant 0 : i32
    return %arg0, %c0_i32 : i32, i32
  }
  func.func @transform_1(%arg0: i32) -> (i32, i32) {
    %c0_i32 = arith.constant 0 : i32
    %c0_i32_0 = arith.constant 0 : i32
    %c0_i32_1 = arith.constant 0 : i32
    return %c0_i32, %c0_i32_0 : i32, i32
  }
  func.func @transform_2(%arg0: i32) -> (i32, i32) {
    %c0_i32 = arith.constant 0 : i32
    %c0_i32_0 = arith.constant 0 : i32
    %c0_i32_1 = arith.constant 0 : i32
    return %c0_i32, %c0_i32_0 : i32, i32
  }
  func.func @transform_3(%arg0: i32) -> (i32, i32) {
    %c0_i32 = arith.constant 0 : i32
    %c0_i32_0 = arith.constant 0 : i32
    return %arg0, %c0_i32 : i32, i32
  }
}

</mosaic_0001>

<llo_original>
// kernel: tpu_custom_call.1
$region0: #{tpu_custom_call.1}
  #allocation0 [shape = 'u32[]', space=smem, size = 0x4, offset = 0x4, fixed_abs, tag = 'smem constant byte address 0x4 - core index']
  #allocation1 [shape = 'u32[72,128]{1,0:T(1,128)}', space=vmem, size = 0x9000, scoped, tag = 'internal scratch']
  %s0 = inlined_call_operand.hbm [shape: bf16[512,128], index: 0, kind: input, shape index: {}]
  %s1 = inlined_call_operand.hbm [shape: bf16[128,128], index: 1, kind: input, shape index: {}]
  %s2 = inlined_call_operand.vmem [shape: f32[1,128], index: 2, kind: input, shape index: {}]
  %s3 = inlined_call_operand.hbm [shape: bf16[512,128], index: 3, kind: output, shape index: {}]
  %s4 = sld [smem:[#allocation0]]
  $region30: #{tpu_custom_call.1} parent=0
    _
  %s6 = ssub.s32 1, %s4
  %s7 = scalar_select 0, %s6, %s4
  $region1: #{tpu_custom_call.1} parent=0
    #allocation2 [shape = 'u8[131072]{0}', space=vmem, size = 0x20000, scoped, tag = 'input window, operand 0, single buffered']
    #allocation3 [shape = 's32[1]{0}', space=sflag, size = 0x4, scoped, tag = 'scoped memory for tpu_custom_call.1']
    #allocation4 [shape = 's32[1]{0}', space=sflag, size = 0x4, scoped, tag = 'scoped memory for tpu_custom_call.1']
    #allocation5 [shape = 'u8[32768]{0}', space=vmem, size = 0x8000, scoped, tag = 'input window, operand 1, single buffered']
    #allocation6 [shape = 's32[1]{0}', space=sflag, size = 0x4, scoped, tag = 'scoped memory for tpu_custom_call.1']
    #allocation7 [shape = 'u8[131072]{0}', space=vmem, size = 0x20000, scoped, tag = 'output window, operand 0, single buffered']
    %8 = vsyncpa [#allocation3], 0
    %9 = vsyncpa [#allocation6], 0
    %10 = vsyncpa [#allocation4], 0
    // Predicated region
    $region2: #{tpu_custom_call.1} parent=1 // pred_check
      _
    $region3: #{tpu_custom_call.1} parent=1 // pred_check_branch
      %12 = sbr.rel (0) target = $region5
    $region4: #{tpu_custom_call.1} parent=1 // pred_region
      %14 = vsyncadd [#allocation3], 0
      %s15 = sshll.u32 %s0, 4
      %s16 = int_to_ptr.hbm [resolvable:$true] %s15
      %s17 = sshll.u32 [#allocation2], 4
      %s18 = int_to_ptr.vmem [resolvable:$true] %s17
      %23 = dma.hbm_to_vmem [thread:$0]  %s16, 4096, %s18, [#allocation3], 64, 64, 4
    $region5: #{tpu_custom_call.1} parent=1 // pred_fallthru
      _
    // Predicated region
    $region6: #{tpu_custom_call.1} parent=1 // pred_check
      _
    $region7: #{tpu_custom_call.1} parent=1 // pred_check_branch
      %25 = sbr.rel (0) target = $region9
    $region8: #{tpu_custom_call.1} parent=1 // pred_region
      %27 = vsyncadd [#allocation6], 0
      %s28 = sshll.u32 %s1, 4
      %s29 = int_to_ptr.hbm [resolvable:$true] %s28
      %s30 = sshll.u32 [#allocation5], 4
      %s31 = int_to_ptr.vmem [resolvable:$true] %s30
      %36 = dma.hbm_to_vmem [thread:$0]  %s29, 1024, %s31, [#allocation6], 64, 64, 4
    $region9: #{tpu_custom_call.1} parent=1 // pred_fallthru
      _
    // Predicated region
    $region10: #{tpu_custom_call.1} parent=1 // pred_check
      _
    $region11: #{tpu_custom_call.1} parent=1 // pred_check_branch
      %38 = sbr.rel (0) target = $region13
    $region12: #{tpu_custom_call.1} parent=1 // pred_region
      _
    $region13: #{tpu_custom_call.1} parent=1 // pred_fallthru
      _
    // Predicated region
    $region14: #{tpu_custom_call.1} parent=1 // pred_check
      _
    $region15: #{tpu_custom_call.1} parent=1 // pred_check_branch
      %40 = sbr.rel (0) target = $region17
    $region16: #{tpu_custom_call.1} parent=1 // pred_region
      %42 = dma.done [#allocation3], 4096
    $region17: #{tpu_custom_call.1} parent=1 // pred_fallthru
      _
    // Predicated region
    $region18: #{tpu_custom_call.1} parent=1 // pred_check
      _
    $region19: #{tpu_custom_call.1} parent=1 // pred_check_branch
      %44 = sbr.rel (0) target = $region21
    $region20: #{tpu_custom_call.1} parent=1 // pred_region
      %46 = dma.done [#allocation6], 1024
    $region21: #{tpu_custom_call.1} parent=1 // pred_fallthru
      _
    %v47 = vld [vmem:[#allocation2] sm:$0xf]
    %v48 = vld [vmem:[#allocation2 + $0x4] sm:$0xf]
    %v49 = vld [vmem:[#allocation2 + $0x8] sm:$0xf]
    %v50 = vld [vmem:[#allocation2 + $0xc] sm:$0xf]
    %v51 = vld [vmem:[#allocation2 + $0x10] sm:$0xf]
    %v52 = vld [vmem:[#allocation2 + $0x14] sm:$0xf]
    %v53 = vld [vmem:[#allocation2 + $0x18] sm:$0xf]
    %v54 = vld [vmem:[#allocation2 + $0x1c] sm:$0xf]
    %v55 = vld [vmem:[#allocation2 + $0x20] sm:$0xf]
    %v56 = vld [vmem:[#allocation2 + $0x24] sm:$0xf]
    %v57 = vld [vmem:[#allocation2 + $0x28] sm:$0xf]
    %v58 = vld [vmem:[#allocation2 + $0x2c] sm:$0xf]
    %v59 = vld [vmem:[#allocation2 + $0x30] sm:$0xf]
    %v60 = vld [vmem:[#allocation2 + $0x34] sm:$0xf]
    %v61 = vld [vmem:[#allocation2 + $0x38] sm:$0xf]
    %v62 = vld [vmem:[#allocation2 + $0x3c] sm:$0xf]
    %v63 = vld [vmem:[#allocation2 + $0x40] sm:$0xf]
    %v64 = vld [vmem:[#allocation2 + $0x44] sm:$0xf]
    %v65 = vld [vmem:[#allocation2 + $0x48] sm:$0xf]
    %v66 = vld [vmem:[#allocation2 + $0x4c] sm:$0xf]
    %v67 = vld [vmem:[#allocation2 + $0x50] sm:$0xf]
    %v68 = vld [vmem:[#allocation2 + $0x54] sm:$0xf]
    %v69 = vld [vmem:[#allocation2 + $0x58] sm:$0xf]
    %v70 = vld [vmem:[#allocation2 + $0x5c] sm:$0xf]
    %v71 = vld [vmem:[#allocation2 + $0x60] sm:$0xf]
    %v72 = vld [vmem:[#allocation2 + $0x64] sm:$0xf]
    %v73 = vld [vmem:[#allocation2 + $0x68] sm:$0xf]
    %v74 = vld [vmem:[#allocation2 + $0x6c] sm:$0xf]
    %v75 = vld [vmem:[#allocation2 + $0x70] sm:$0xf]
    %v76 = vld [vmem:[#allocation2 + $0x74] sm:$0xf]
    %v77 = vld [vmem:[#allocation2 + $0x78] sm:$0xf]
    %v78 = vld [vmem:[#allocation2 + $0x7c] sm:$0xf]
    %v79 = vld [vmem:[#allocation2 + $0x80] sm:$0xf]
    %v80 = vld [vmem:[#allocation2 + $0x84] sm:$0xf]
    %v81 = vld [vmem:[#allocation2 + $0x88] sm:$0xf]
    %v82 = vld [vmem:[#allocation2 + $0x8c] sm:$0xf]
    %v83 = vld [vmem:[#allocation2 + $0x90] sm:$0xf]
    %v84 = vld [vmem:[#allocation2 + $0x94] sm:$0xf]
    %v85 = vld [vmem:[#allocation2 + $0x98] sm:$0xf]
    %v86 = vld [vmem:[#allocation2 + $0x9c] sm:$0xf]
    %v87 = vld [vmem:[#allocation2 + $0xa0] sm:$0xf]
    %v88 = vld [vmem:[#allocation2 + $0xa4] sm:$0xf]
    %v89 = vld [vmem:[#allocation2 + $0xa8] sm:$0xf]
    %v90 = vld [vmem:[#allocation2 + $0xac] sm:$0xf]
    %v91 = vld [vmem:[#allocation2 + $0xb0] sm:$0xf]
    %v92 = vld [vmem:[#allocation2 + $0xb4] sm:$0xf]
    %v93 = vld [vmem:[#allocation2 + $0xb8] sm:$0xf]
    %v94 = vld [vmem:[#allocation2 + $0xbc] sm:$0xf]
    %v95 = vld [vmem:[#allocation2 + $0xc0] sm:$0xf]
    %v96 = vld [vmem:[#allocation2 + $0xc4] sm:$0xf]
    %v97 = vld [vmem:[#allocation2 + $0xc8] sm:$0xf]
    %v98 = vld [vmem:[#allocation2 + $0xcc] sm:$0xf]
    %v99 = vld [vmem:[#allocation2 + $0xd0] sm:$0xf]
    %v100 = vld [vmem:[#allocation2 + $0xd4] sm:$0xf]
    %v101 = vld [vmem:[#allocation2 + $0xd8] sm:$0xf]
    %v102 = vld [vmem:[#allocation2 + $0xdc] sm:$0xf]
    %v103 = vld [vmem:[#allocation2 + $0xe0] sm:$0xf]
    %v104 = vld [vmem:[#allocation2 + $0xe4] sm:$0xf]
    %v105 = vld [vmem:[#allocation2 + $0xe8] sm:$0xf]
    %v106 = vld [vmem:[#allocation2 + $0xec] sm:$0xf]
    %v107 = vld [vmem:[#allocation2 + $0xf0] sm:$0xf]
    %v108 = vld [vmem:[#allocation2 + $0xf4] sm:$0xf]
    %v109 = vld [vmem:[#allocation2 + $0xf8] sm:$0xf]
    %v110 = vld [vmem:[#allocation2 + $0xfc] sm:$0xf]
    %v111 = vld [vmem:[#allocation5] sm:$0xf]
    %v112 = vld [vmem:[#allocation5 + $0x4] sm:$0xf]
    %v113 = vld [vmem:[#allocation5 + $0x8] sm:$0xf]
    %v114 = vld [vmem:[#allocation5 + $0xc] sm:$0xf]
    %v115 = vld [vmem:[#allocation5 + $0x10] sm:$0xf]
    %v116 = vld [vmem:[#allocation5 + $0x14] sm:$0xf]
    %v117 = vld [vmem:[#allocation5 + $0x18] sm:$0xf]
    %v118 = vld [vmem:[#allocation5 + $0x1c] sm:$0xf]
    %v119 = vld [vmem:[#allocation5 + $0x20] sm:$0xf]
    %v120 = vld [vmem:[#allocation5 + $0x24] sm:$0xf]
    %v121 = vld [vmem:[#allocation5 + $0x28] sm:$0xf]
    %v122 = vld [vmem:[#allocation5 + $0x2c] sm:$0xf]
    %v123 = vld [vmem:[#allocation5 + $0x30] sm:$0xf]
    %v124 = vld [vmem:[#allocation5 + $0x34] sm:$0xf]
    %v125 = vld [vmem:[#allocation5 + $0x38] sm:$0xf]
    %v126 = vld [vmem:[#allocation5 + $0x3c] sm:$0xf]
    %v127 = vld [vmem:[%s2] sm:$0x1]
    %v129 = vperm.slane %v127, 0
    %v195 = vunpack.c.l.b16 %v47
    %v196 = vunpack.c.l.b16 %v48
    %v197 = vunpack.c.l.b16 %v49
    %v198 = vunpack.c.l.b16 %v50
    %v199 = vunpack.c.l.b16 %v51
    %v200 = vunpack.c.l.b16 %v52
    %v201 = vunpack.c.l.b16 %v53
    %v202 = vunpack.c.l.b16 %v54
    %v203 = vunpack.c.l.b16 %v55
    %v204 = vunpack.c.l.b16 %v56
    %v205 = vunpack.c.l.b16 %v57
    %v206 = vunpack.c.l.b16 %v58
    %v207 = vunpack.c.l.b16 %v59
    %v208 = vunpack.c.l.b16 %v60
    %v209 = vunpack.c.l.b16 %v61
    %v210 = vunpack.c.l.b16 %v62
    %v211 = vunpack.c.l.b16 %v63
    %v212 = vunpack.c.l.b16 %v64
    %v213 = vunpack.c.l.b16 %v65
    %v214 = vunpack.c.l.b16 %v66
    %v215 = vunpack.c.l.b16 %v67
    %v216 = vunpack.c.l.b16 %v68
    %v217 = vunpack.c.l.b16 %v69
    %v218 = vunpack.c.l.b16 %v70
    %v219 = vunpack.c.l.b16 %v71
    %v220 = vunpack.c.l.b16 %v72
    %v221 = vunpack.c.l.b16 %v73
    %v222 = vunpack.c.l.b16 %v74
    %v223 = vunpack.c.l.b16 %v75
    %v224 = vunpack.c.l.b16 %v76
    %v225 = vunpack.c.l.b16 %v77
    %v226 = vunpack.c.l.b16 %v78
    %v227 = vunpack.c.l.b16 %v79
    %v228 = vunpack.c.l.b16 %v80
    %v229 = vunpack.c.l.b16 %v81
    %v230 = vunpack.c.l.b16 %v82
    %v231 = vunpack.c.l.b16 %v83
    %v232 = vunpack.c.l.b16 %v84
    %v233 = vunpack.c.l.b16 %v85
    %v234 = vunpack.c.l.b16 %v86
    %v235 = vunpack.c.l.b16 %v87
    %v236 = vunpack.c.l.b16 %v88
    %v237 = vunpack.c.l.b16 %v89
    %v238 = vunpack.c.l.b16 %v90
    %v239 = vunpack.c.l.b16 %v91
    %v240 = vunpack.c.l.b16 %v92
    %v241 = vunpack.c.l.b16 %v93
    %v242 = vunpack.c.l.b16 %v94
    %v243 = vunpack.c.l.b16 %v95
    %v244 = vunpack.c.l.b16 %v96
    %v245 = vunpack.c.l.b16 %v97
    %v246 = vunpack.c.l.b16 %v98
    %v247 = vunpack.c.l.b16 %v99
    %v248 = vunpack.c.l.b16 %v100
    %v249 = vunpack.c.l.b16 %v101
    %v250 = vunpack.c.l.b16 %v102
    %v251 = vunpack.c.l.b16 %v103
    %v252 = vunpack.c.l.b16 %v104
    %v253 = vunpack.c.l.b16 %v105
    %v254 = vunpack.c.l.b16 %v106
    %v255 = vunpack.c.l.b16 %v107
    %v256 = vunpack.c.l.b16 %v108
    %v257 = vunpack.c.l.b16 %v109
    %v258 = vunpack.c.l.b16 %v110
    %v259 = vpack.c.b16 %v196, %v195
    %v260 = vpack.c.b16 %v198, %v197
    %v261 = vpack.c.b16 %v200, %v199
    %v262 = vpack.c.b16 %v202, %v201
    %v263 = vpack.c.b16 %v204, %v203
    %v264 = vpack.c.b16 %v206, %v205
    %v265 = vpack.c.b16 %v208, %v207
    %v266 = vpack.c.b16 %v210, %v209
    %v267 = vpack.c.b16 %v212, %v211
    %v268 = vpack.c.b16 %v214, %v213
    %v269 = vpack.c.b16 %v216, %v215
    %v270 = vpack.c.b16 %v218, %v217
    %v271 = vpack.c.b16 %v220, %v219
    %v272 = vpack.c.b16 %v222, %v221
    %v273 = vpack.c.b16 %v224, %v223
    %v274 = vpack.c.b16 %v226, %v225
    %v275 = vpack.c.b16 %v228, %v227
    %v276 = vpack.c.b16 %v230, %v229
    %v277 = vpack.c.b16 %v232, %v231
    %v278 = vpack.c.b16 %v234, %v233
    %v279 = vpack.c.b16 %v236, %v235
    %v280 = vpack.c.b16 %v238, %v237
    %v281 = vpack.c.b16 %v240, %v239
    %v282 = vpack.c.b16 %v242, %v241
    %v283 = vpack.c.b16 %v244, %v243
    %v284 = vpack.c.b16 %v246, %v245
    %v285 = vpack.c.b16 %v248, %v247
    %v286 = vpack.c.b16 %v250, %v249
    %v287 = vpack.c.b16 %v252, %v251
    %v288 = vpack.c.b16 %v254, %v253
    %v289 = vpack.c.b16 %v256, %v255
    %v290 = vpack.c.b16 %v258, %v257
    %v339 = vunpack.c.l.b16 %v111
    %v340 = vunpack.c.l.b16 %v112
    %v341 = vunpack.c.l.b16 %v113
    %v342 = vunpack.c.l.b16 %v114
    %v343 = vunpack.c.l.b16 %v115
    %v344 = vunpack.c.l.b16 %v116
    %v345 = vunpack.c.l.b16 %v117
    %v346 = vunpack.c.l.b16 %v118
    %v347 = vunpack.c.l.b16 %v119
    %v348 = vunpack.c.l.b16 %v120
    %v349 = vunpack.c.l.b16 %v121
    %v350 = vunpack.c.l.b16 %v122
    %v351 = vunpack.c.l.b16 %v123
    %v352 = vunpack.c.l.b16 %v124
    %v353 = vunpack.c.l.b16 %v125
    %v354 = vunpack.c.l.b16 %v126
    %v355 = vpack.c.b16 %v340, %v339
    %v356 = vpack.c.b16 %v342, %v341
    %v357 = vpack.c.b16 %v344, %v343
    %v358 = vpack.c.b16 %v346, %v345
    %v359 = vpack.c.b16 %v348, %v347
    %v360 = vpack.c.b16 %v350, %v349
    %v361 = vpack.c.b16 %v352, %v351
    %v362 = vpack.c.b16 %v354, %v353
    %371 = vmatpush.bf16.msra.mxu0 %v362
    %372 = vmatpush.bf16.msra.mxu0 %v361
    %373 = vmatpush.bf16.msra.mxu0 %v360
    %374 = vmatpush.bf16.msra.mxu0 %v359
    %375 = vmatpush.bf16.msra.mxu0 %v358
    %376 = vmatpush.bf16.msra.mxu0 %v357
    %377 = vmatpush.bf16.msra.mxu0 %v356
    %378 = vmatpush.bf16.msra.mxu0 %v355
    %379 = vmatmul.bf16.gmra.mxu0 %v259
    %v380 = vpop.f32.mrf.mxu0
    %v381 = vadd.f32 %v129, %v380
    %v382 = vpop.f32.mrf.mxu0
    %v383 = vadd.f32 %v129, %v382
    %384 = vmatmul.bf16.gmra.mxu0 %v260
    %v385 = vpop.f32.mrf.mxu0
    %v386 = vadd.f32 %v129, %v385
    %v387 = vpop.f32.mrf.mxu0
    %v388 = vadd.f32 %v129, %v387
    %389 = vmatmul.bf16.gmra.mxu0 %v261
    %v390 = vpop.f32.mrf.mxu0
    %v391 = vadd.f32 %v129, %v390
    %v392 = vpop.f32.mrf.mxu0
    %v393 = vadd.f32 %v129, %v392
    %394 = vmatmul.bf16.gmra.mxu0 %v262
    %v395 = vpop.f32.mrf.mxu0
    %v396 = vadd.f32 %v129, %v395
    %v397 = vpop.f32.mrf.mxu0
    %v398 = vadd.f32 %v129, %v397
    %399 = vmatmul.bf16.gmra.mxu0 %v263
    %v400 = vpop.f32.mrf.mxu0
    %v401 = vadd.f32 %v129, %v400
    %v402 = vpop.f32.mrf.mxu0
    %v403 = vadd.f32 %v129, %v402
    %404 = vmatmul.bf16.gmra.mxu0 %v264
    %v405 = vpop.f32.mrf.mxu0
    %v406 = vadd.f32 %v129, %v405
    %v407 = vpop.f32.mrf.mxu0
    %v408 = vadd.f32 %v129, %v407
    %409 = vmatmul.bf16.gmra.mxu0 %v265
    %v410 = vpop.f32.mrf.mxu0
    %v411 = vadd.f32 %v129, %v410
    %v412 = vpop.f32.mrf.mxu0
    %v413 = vadd.f32 %v129, %v412
    %414 = vmatmul.bf16.gmra.mxu0 %v266
    %v415 = vpop.f32.mrf.mxu0
    %v416 = vadd.f32 %v129, %v415
    %v417 = vpop.f32.mrf.mxu0
    %v418 = vadd.f32 %v129, %v417
    %419 = vmatmul.bf16.gmra.mxu0 %v267
    %v420 = vpop.f32.mrf.mxu0
    %v421 = vadd.f32 %v129, %v420
    %v422 = vpop.f32.mrf.mxu0
    %v423 = vadd.f32 %v129, %v422
    %424 = vmatmul.bf16.gmra.mxu0 %v268
    %v425 = vpop.f32.mrf.mxu0
    %v426 = vadd.f32 %v129, %v425
    %v427 = vpop.f32.mrf.mxu0
    %v428 = vadd.f32 %v129, %v427
    %429 = vmatmul.bf16.gmra.mxu0 %v269
    %v430 = vpop.f32.mrf.mxu0
    %v431 = vadd.f32 %v129, %v430
    %v432 = vpop.f32.mrf.mxu0
    %v433 = vadd.f32 %v129, %v432
    %434 = vmatmul.bf16.gmra.mxu0 %v270
    %v435 = vpop.f32.mrf.mxu0
    %v436 = vadd.f32 %v129, %v435
    %v437 = vpop.f32.mrf.mxu0
    %v438 = vadd.f32 %v129, %v437
    %439 = vmatmul.bf16.gmra.mxu0 %v271
    %v440 = vpop.f32.mrf.mxu0
    %v441 = vadd.f32 %v129, %v440
    %v442 = vpop.f32.mrf.mxu0
    %v443 = vadd.f32 %v129, %v442
    %444 = vmatmul.bf16.gmra.mxu0 %v272
    %v445 = vpop.f32.mrf.mxu0
    %v446 = vadd.f32 %v129, %v445
    %v447 = vpop.f32.mrf.mxu0
    %v448 = vadd.f32 %v129, %v447
    %449 = vmatmul.bf16.gmra.mxu0 %v273
    %v450 = vpop.f32.mrf.mxu0
    %v451 = vadd.f32 %v129, %v450
    %v452 = vpop.f32.mrf.mxu0
    %v453 = vadd.f32 %v129, %v452
    %454 = vmatmul.bf16.gmra.mxu0 %v274
    %v455 = vpop.f32.mrf.mxu0
    %v456 = vadd.f32 %v129, %v455
    %v457 = vpop.f32.mrf.mxu0
    %v458 = vadd.f32 %v129, %v457
    %459 = vmatmul.bf16.gmra.mxu0 %v275
    %v460 = vpop.f32.mrf.mxu0
    %v461 = vadd.f32 %v129, %v460
    %v462 = vpop.f32.mrf.mxu0
    %v463 = vadd.f32 %v129, %v462
    %464 = vmatmul.bf16.gmra.mxu0 %v276
    %v465 = vpop.f32.mrf.mxu0
    %v466 = vadd.f32 %v129, %v465
    %v467 = vpop.f32.mrf.mxu0
    %v468 = vadd.f32 %v129, %v467
    %469 = vmatmul.bf16.gmra.mxu0 %v277
    %v470 = vpop.f32.mrf.mxu0
    %v471 = vadd.f32 %v129, %v470
    %v472 = vpop.f32.mrf.mxu0
    %v473 = vadd.f32 %v129, %v472
    %474 = vmatmul.bf16.gmra.mxu0 %v278
    %v475 = vpop.f32.mrf.mxu0
    %v476 = vadd.f32 %v129, %v475
    %v477 = vpop.f32.mrf.mxu0
    %v478 = vadd.f32 %v129, %v477
    %479 = vmatmul.bf16.gmra.mxu0 %v279
    %v480 = vpop.f32.mrf.mxu0
    %v481 = vadd.f32 %v129, %v480
    %v482 = vpop.f32.mrf.mxu0
    %v483 = vadd.f32 %v129, %v482
    %484 = vmatmul.bf16.gmra.mxu0 %v280
    %v485 = vpop.f32.mrf.mxu0
    %v486 = vadd.f32 %v129, %v485
    %v487 = vpop.f32.mrf.mxu0
    %v488 = vadd.f32 %v129, %v487
    %489 = vmatmul.bf16.gmra.mxu0 %v281
    %v490 = vpop.f32.mrf.mxu0
    %v491 = vadd.f32 %v129, %v490
    %v492 = vpop.f32.mrf.mxu0
    %v493 = vadd.f32 %v129, %v492
    %494 = vmatmul.bf16.gmra.mxu0 %v282
    %v495 = vpop.f32.mrf.mxu0
    %v496 = vadd.f32 %v129, %v495
    %v497 = vpop.f32.mrf.mxu0
    %v498 = vadd.f32 %v129, %v497
    %499 = vmatmul.bf16.gmra.mxu0 %v283
    %v500 = vpop.f32.mrf.mxu0
    %v501 = vadd.f32 %v129, %v500
    %v502 = vpop.f32.mrf.mxu0
    %v503 = vadd.f32 %v129, %v502
    %504 = vmatmul.bf16.gmra.mxu0 %v284
    %v505 = vpop.f32.mrf.mxu0
    %v506 = vadd.f32 %v129, %v505
    %v507 = vpop.f32.mrf.mxu0
    %v508 = vadd.f32 %v129, %v507
    %509 = vmatmul.bf16.gmra.mxu0 %v285
    %v510 = vpop.f32.mrf.mxu0
    %v511 = vadd.f32 %v129, %v510
    %v512 = vpop.f32.mrf.mxu0
    %v513 = vadd.f32 %v129, %v512
    %514 = vmatmul.bf16.gmra.mxu0 %v286
    %v515 = vpop.f32.mrf.mxu0
    %v516 = vadd.f32 %v129, %v515
    %v517 = vpop.f32.mrf.mxu0
    %v518 = vadd.f32 %v129, %v517
    %519 = vmatmul.bf16.gmra.mxu0 %v287
    %v520 = vpop.f32.mrf.mxu0
    %v521 = vadd.f32 %v129, %v520
    %v522 = vpop.f32.mrf.mxu0
    %v523 = vadd.f32 %v129, %v522
    %524 = vmatmul.bf16.gmra.mxu0 %v288
    %v525 = vpop.f32.mrf.mxu0
    %v526 = vadd.f32 %v129, %v525
    %v527 = vpop.f32.mrf.mxu0
    %v528 = vadd.f32 %v129, %v527
    %529 = vmatmul.bf16.gmra.mxu0 %v289
    %v530 = vpop.f32.mrf.mxu0
    %v531 = vadd.f32 %v129, %v530
    %v532 = vpop.f32.mrf.mxu0
    %v533 = vadd.f32 %v129, %v532
    %534 = vmatmul.bf16.gmra.mxu0 %v290
    %v535 = vpop.f32.mrf.mxu0
    %v536 = vadd.f32 %v129, %v535
    %v537 = vpop.f32.mrf.mxu0
    %v538 = vadd.f32 %v129, %v537
    %539 = vdwg.mxu0
    %vm540 = vcmp.gt.f32.partialorder %v381, 0.0
    %vm541 = vcmp.gt.f32.partialorder %v383, 0.0
    %vm542 = vcmp.gt.f32.partialorder %v386, 0.0
    %vm543 = vcmp.gt.f32.partialorder %v388, 0.0
    %vm544 = vcmp.gt.f32.partialorder %v391, 0.0
    %vm545 = vcmp.gt.f32.partialorder %v393, 0.0
    %vm546 = vcmp.gt.f32.partialorder %v396, 0.0
    %vm547 = vcmp.gt.f32.partialorder %v398, 0.0
    %vm548 = vcmp.gt.f32.partialorder %v401, 0.0
    %vm549 = vcmp.gt.f32.partialorder %v403, 0.0
    %vm550 = vcmp.gt.f32.partialorder %v406, 0.0
    %vm551 = vcmp.gt.f32.partialorder %v408, 0.0
    %vm552 = vcmp.gt.f32.partialorder %v411, 0.0
    %vm553 = vcmp.gt.f32.partialorder %v413, 0.0
    %vm554 = vcmp.gt.f32.partialorder %v416, 0.0
    %vm555 = vcmp.gt.f32.partialorder %v418, 0.0
    %vm556 = vcmp.gt.f32.partialorder %v421, 0.0
    %vm557 = vcmp.gt.f32.partialorder %v423, 0.0
    %vm558 = vcmp.gt.f32.partialorder %v426, 0.0
    %vm559 = vcmp.gt.f32.partialorder %v428, 0.0
    %vm560 = vcmp.gt.f32.partialorder %v431, 0.0
    %vm561 = vcmp.gt.f32.partialorder %v433, 0.0
    %vm562 = vcmp.gt.f32.partialorder %v436, 0.0
    %vm563 = vcmp.gt.f32.partialorder %v438, 0.0
    %vm564 = vcmp.gt.f32.partialorder %v441, 0.0
    %vm565 = vcmp.gt.f32.partialorder %v443, 0.0
    %vm566 = vcmp.gt.f32.partialorder %v446, 0.0
    %vm567 = vcmp.gt.f32.partialorder %v448, 0.0
    %vm568 = vcmp.gt.f32.partialorder %v451, 0.0
    %vm569 = vcmp.gt.f32.partialorder %v453, 0.0
    %vm570 = vcmp.gt.f32.partialorder %v456, 0.0
    %vm571 = vcmp.gt.f32.partialorder %v458, 0.0
    %vm572 = vcmp.gt.f32.partialorder %v461, 0.0
    %vm573 = vcmp.gt.f32.partialorder %v463, 0.0
    %vm574 = vcmp.gt.f32.partialorder %v466, 0.0
    %vm575 = vcmp.gt.f32.partialorder %v468, 0.0
    %vm576 = vcmp.gt.f32.partialorder %v471, 0.0
    %vm577 = vcmp.gt.f32.partialorder %v473, 0.0
    %vm578 = vcmp.gt.f32.partialorder %v476, 0.0
    %vm579 = vcmp.gt.f32.partialorder %v478, 0.0
    %vm580 = vcmp.gt.f32.partialorder %v481, 0.0
    %vm581 = vcmp.gt.f32.partialorder %v483, 0.0
    %vm582 = vcmp.gt.f32.partialorder %v486, 0.0
    %vm583 = vcmp.gt.f32.partialorder %v488, 0.0
    %vm584 = vcmp.gt.f32.partialorder %v491, 0.0
    %vm585 = vcmp.gt.f32.partialorder %v493, 0.0
    %vm586 = vcmp.gt.f32.partialorder %v496, 0.0
    %vm587 = vcmp.gt.f32.partialorder %v498, 0.0
    %vm588 = vcmp.gt.f32.partialorder %v501, 0.0
    %vm589 = vcmp.gt.f32.partialorder %v503, 0.0
    %vm590 = vcmp.gt.f32.partialorder %v506, 0.0
    %vm591 = vcmp.gt.f32.partialorder %v508, 0.0
    %vm592 = vcmp.gt.f32.partialorder %v511, 0.0
    %vm593 = vcmp.gt.f32.partialorder %v513, 0.0
    %vm594 = vcmp.gt.f32.partialorder %v516, 0.0
    %vm595 = vcmp.gt.f32.partialorder %v518, 0.0
    %vm596 = vcmp.gt.f32.partialorder %v521, 0.0
    %vm597 = vcmp.gt.f32.partialorder %v523, 0.0
    %vm598 = vcmp.gt.f32.partialorder %v526, 0.0
    %vm599 = vcmp.gt.f32.partialorder %v528, 0.0
    %vm600 = vcmp.gt.f32.partialorder %v531, 0.0
    %vm601 = vcmp.gt.f32.partialorder %v533, 0.0
    %vm602 = vcmp.gt.f32.partialorder %v536, 0.0
    %vm603 = vcmp.gt.f32.partialorder %v538, 0.0
    %v604 = vmul.f32 %v381, 0.2
    %v605 = vmul.f32 %v383, 0.2
    %v606 = vmul.f32 %v386, 0.2
    %v607 = vmul.f32 %v388, 0.2
    %v608 = vmul.f32 %v391, 0.2
    %v609 = vmul.f32 %v393, 0.2
    %v610 = vmul.f32 %v396, 0.2
    %v611 = vmul.f32 %v398, 0.2
    %v612 = vmul.f32 %v401, 0.2
    %v613 = vmul.f32 %v403, 0.2
    %v614 = vmul.f32 %v406, 0.2
    %v615 = vmul.f32 %v408, 0.2
    %v616 = vmul.f32 %v411, 0.2
    %v617 = vmul.f32 %v413, 0.2
    %v618 = vmul.f32 %v416, 0.2
    %v619 = vmul.f32 %v418, 0.2
    %v620 = vmul.f32 %v421, 0.2
    %v621 = vmul.f32 %v423, 0.2
    %v622 = vmul.f32 %v426, 0.2
    %v623 = vmul.f32 %v428, 0.2
    %v624 = vmul.f32 %v431, 0.2
    %v625 = vmul.f32 %v433, 0.2
    %v626 = vmul.f32 %v436, 0.2
    %v627 = vmul.f32 %v438, 0.2
    %v628 = vmul.f32 %v441, 0.2
    %v629 = vmul.f32 %v443, 0.2
    %v630 = vmul.f32 %v446, 0.2
    %v631 = vmul.f32 %v448, 0.2
    %v632 = vmul.f32 %v451, 0.2
    %v633 = vmul.f32 %v453, 0.2
    %v634 = vmul.f32 %v456, 0.2
    %v635 = vmul.f32 %v458, 0.2
    %v636 = vmul.f32 %v461, 0.2
    %v637 = vmul.f32 %v463, 0.2
    %v638 = vmul.f32 %v466, 0.2
    %v639 = vmul.f32 %v468, 0.2
    %v640 = vmul.f32 %v471, 0.2
    %v641 = vmul.f32 %v473, 0.2
    %v642 = vmul.f32 %v476, 0.2
    %v643 = vmul.f32 %v478, 0.2
    %v644 = vmul.f32 %v481, 0.2
    %v645 = vmul.f32 %v483, 0.2
    %v646 = vmul.f32 %v486, 0.2
    %v647 = vmul.f32 %v488, 0.2
    %v648 = vmul.f32 %v491, 0.2
    %v649 = vmul.f32 %v493, 0.2
    %v650 = vmul.f32 %v496, 0.2
    %v651 = vmul.f32 %v498, 0.2
    %v652 = vmul.f32 %v501, 0.2
    %v653 = vmul.f32 %v503, 0.2
    %v654 = vmul.f32 %v506, 0.2
    %v655 = vmul.f32 %v508, 0.2
    %v656 = vmul.f32 %v511, 0.2
    %v657 = vmul.f32 %v513, 0.2
    %v658 = vmul.f32 %v516, 0.2
    %v659 = vmul.f32 %v518, 0.2
    %v660 = vmul.f32 %v521, 0.2
    %v661 = vmul.f32 %v523, 0.2
    %v662 = vmul.f32 %v526, 0.2
    %v663 = vmul.f32 %v528, 0.2
    %v664 = vmul.f32 %v531, 0.2
    %v665 = vmul.f32 %v533, 0.2
    %v666 = vmul.f32 %v536, 0.2
    %v667 = vmul.f32 %v538, 0.2
    %v668 = vsel %vm540, %v381, %v604
    %v669 = vsel %vm541, %v383, %v605
    %v670 = vsel %vm542, %v386, %v606
    %v671 = vsel %vm543, %v388, %v607
    %v672 = vsel %vm544, %v391, %v608
    %v673 = vsel %vm545, %v393, %v609
    %v674 = vsel %vm546, %v396, %v610
    %v675 = vsel %vm547, %v398, %v611
    %v676 = vsel %vm548, %v401, %v612
    %v677 = vsel %vm549, %v403, %v613
    %v678 = vsel %vm550, %v406, %v614
    %v679 = vsel %vm551, %v408, %v615
    %v680 = vsel %vm552, %v411, %v616
    %v681 = vsel %vm553, %v413, %v617
    %v682 = vsel %vm554, %v416, %v618
    %v683 = vsel %vm555, %v418, %v619
    %v684 = vsel %vm556, %v421, %v620
    %v685 = vsel %vm557, %v423, %v621
    %v686 = vsel %vm558, %v426, %v622
    %v687 = vsel %vm559, %v428, %v623
    %v688 = vsel %vm560, %v431, %v624
    %v689 = vsel %vm561, %v433, %v625
    %v690 = vsel %vm562, %v436, %v626
    %v691 = vsel %vm563, %v438, %v627
    %v692 = vsel %vm564, %v441, %v628
    %v693 = vsel %vm565, %v443, %v629
    %v694 = vsel %vm566, %v446, %v630
    %v695 = vsel %vm567, %v448, %v631
    %v696 = vsel %vm568, %v451, %v632
    %v697 = vsel %vm569, %v453, %v633
    %v698 = vsel %vm570, %v456, %v634
    %v699 = vsel %vm571, %v458, %v635
    %v700 = vsel %vm572, %v461, %v636
    %v701 = vsel %vm573, %v463, %v637
    %v702 = vsel %vm574, %v466, %v638
    %v703 = vsel %vm575, %v468, %v639
    %v704 = vsel %vm576, %v471, %v640
    %v705 = vsel %vm577, %v473, %v641
    %v706 = vsel %vm578, %v476, %v642
    %v707 = vsel %vm579, %v478, %v643
    %v708 = vsel %vm580, %v481, %v644
    %v709 = vsel %vm581, %v483, %v645
    %v710 = vsel %vm582, %v486, %v646
    %v711 = vsel %vm583, %v488, %v647
    %v712 = vsel %vm584, %v491, %v648
    %v713 = vsel %vm585, %v493, %v649
    %v714 = vsel %vm586, %v496, %v650
    %v715 = vsel %vm587, %v498, %v651
    %v716 = vsel %vm588, %v501, %v652
    %v717 = vsel %vm589, %v503, %v653
    %v718 = vsel %vm590, %v506, %v654
    %v719 = vsel %vm591, %v508, %v655
    %v720 = vsel %vm592, %v511, %v656
    %v721 = vsel %vm593, %v513, %v657
    %v722 = vsel %vm594, %v516, %v658
    %v723 = vsel %vm595, %v518, %v659
    %v724 = vsel %vm596, %v521, %v660
    %v725 = vsel %vm597, %v523, %v661
    %v726 = vsel %vm598, %v526, %v662
    %v727 = vsel %vm599, %v528, %v663
    %v728 = vsel %vm600, %v531, %v664
    %v729 = vsel %vm601, %v533, %v665
    %v730 = vsel %vm602, %v536, %v666
    %v731 = vsel %vm603, %v538, %v667
    %v732 = vpack.c.bf16 %v668, %v668
    %v733 = vpack.c.bf16 %v669, %v669
    %v734 = vpack.c.bf16 %v670, %v670
    %v735 = vpack.c.bf16 %v671, %v671
    %v736 = vpack.c.bf16 %v672, %v672
    %v737 = vpack.c.bf16 %v673, %v673
    %v738 = vpack.c.bf16 %v674, %v674
    %v739 = vpack.c.bf16 %v675, %v675
    %v740 = vpack.c.bf16 %v676, %v676
    %v741 = vpack.c.bf16 %v677, %v677
    %v742 = vpack.c.bf16 %v678, %v678
    %v743 = vpack.c.bf16 %v679, %v679
    %v744 = vpack.c.bf16 %v680, %v680
    %v745 = vpack.c.bf16 %v681, %v681
    %v746 = vpack.c.bf16 %v682, %v682
    %v747 = vpack.c.bf16 %v683, %v683
    %v748 = vpack.c.bf16 %v684, %v684
    %v749 = vpack.c.bf16 %v685, %v685
    %v750 = vpack.c.bf16 %v686, %v686
    %v751 = vpack.c.bf16 %v687, %v687
    %v752 = vpack.c.bf16 %v688, %v688
    %v753 = vpack.c.bf16 %v689, %v689
    %v754 = vpack.c.bf16 %v690, %v690
    %v755 = vpack.c.bf16 %v691, %v691
    %v756 = vpack.c.bf16 %v692, %v692
    %v757 = vpack.c.bf16 %v693, %v693
    %v758 = vpack.c.bf16 %v694, %v694
    %v759 = vpack.c.bf16 %v695, %v695
    %v760 = vpack.c.bf16 %v696, %v696
    %v761 = vpack.c.bf16 %v697, %v697
    %v762 = vpack.c.bf16 %v698, %v698
    %v763 = vpack.c.bf16 %v699, %v699
    %v764 = vpack.c.bf16 %v700, %v700
    %v765 = vpack.c.bf16 %v701, %v701
    %v766 = vpack.c.bf16 %v702, %v702
    %v767 = vpack.c.bf16 %v703, %v703
    %v768 = vpack.c.bf16 %v704, %v704
    %v769 = vpack.c.bf16 %v705, %v705
    %v770 = vpack.c.bf16 %v706, %v706
    %v771 = vpack.c.bf16 %v707, %v707
    %v772 = vpack.c.bf16 %v708, %v708
    %v773 = vpack.c.bf16 %v709, %v709
    %v774 = vpack.c.bf16 %v710, %v710
    %v775 = vpack.c.bf16 %v711, %v711
    %v776 = vpack.c.bf16 %v712, %v712
    %v777 = vpack.c.bf16 %v713, %v713
    %v778 = vpack.c.bf16 %v714, %v714
    %v779 = vpack.c.bf16 %v715, %v715
    %v780 = vpack.c.bf16 %v716, %v716
    %v781 = vpack.c.bf16 %v717, %v717
    %v782 = vpack.c.bf16 %v718, %v718
    %v783 = vpack.c.bf16 %v719, %v719
    %v784 = vpack.c.bf16 %v720, %v720
    %v785 = vpack.c.bf16 %v721, %v721
    %v786 = vpack.c.bf16 %v722, %v722
    %v787 = vpack.c.bf16 %v723, %v723
    %v788 = vpack.c.bf16 %v724, %v724
    %v789 = vpack.c.bf16 %v725, %v725
    %v790 = vpack.c.bf16 %v726, %v726
    %v791 = vpack.c.bf16 %v727, %v727
    %v792 = vpack.c.bf16 %v728, %v728
    %v793 = vpack.c.bf16 %v729, %v729
    %v794 = vpack.c.bf16 %v730, %v730
    %v795 = vpack.c.bf16 %v731, %v731
    %796 = vst [vmem:[#allocation7] sm:$0xf] %v732
    %797 = vst [vmem:[#allocation7 + $0x4] sm:$0xf] %v733
    %798 = vst [vmem:[#allocation7 + $0x8] sm:$0xf] %v734
    %799 = vst [vmem:[#allocation7 + $0xc] sm:$0xf] %v735
    %800 = vst [vmem:[#allocation7 + $0x10] sm:$0xf] %v736
    %801 = vst [vmem:[#allocation7 + $0x14] sm:$0xf] %v737
    %802 = vst [vmem:[#allocation7 + $0x18] sm:$0xf] %v738
    %803 = vst [vmem:[#allocation7 + $0x1c] sm:$0xf] %v739
    %804 = vst [vmem:[#allocation7 + $0x20] sm:$0xf] %v740
    %805 = vst [vmem:[#allocation7 + $0x24] sm:$0xf] %v741
    %806 = vst [vmem:[#allocation7 + $0x28] sm:$0xf] %v742
    %807 = vst [vmem:[#allocation7 + $0x2c] sm:$0xf] %v743
    %808 = vst [vmem:[#allocation7 + $0x30] sm:$0xf] %v744
    %809 = vst [vmem:[#allocation7 + $0x34] sm:$0xf] %v745
    %810 = vst [vmem:[#allocation7 + $0x38] sm:$0xf] %v746
    %811 = vst [vmem:[#allocation7 + $0x3c] sm:$0xf] %v747
    %812 = vst [vmem:[#allocation7 + $0x40] sm:$0xf] %v748
    %813 = vst [vmem:[#allocation7 + $0x44] sm:$0xf] %v749
    %814 = vst [vmem:[#allocation7 + $0x48] sm:$0xf] %v750
    %815 = vst [vmem:[#allocation7 + $0x4c] sm:$0xf] %v751
    %816 = vst [vmem:[#allocation7 + $0x50] sm:$0xf] %v752
    %817 = vst [vmem:[#allocation7 + $0x54] sm:$0xf] %v753
    %818 = vst [vmem:[#allocation7 + $0x58] sm:$0xf] %v754
    %819 = vst [vmem:[#allocation7 + $0x5c] sm:$0xf] %v755
    %820 = vst [vmem:[#allocation7 + $0x60] sm:$0xf] %v756
    %821 = vst [vmem:[#allocation7 + $0x64] sm:$0xf] %v757
    %822 = vst [vmem:[#allocation7 + $0x68] sm:$0xf] %v758
    %823 = vst [vmem:[#allocation7 + $0x6c] sm:$0xf] %v759
    %824 = vst [vmem:[#allocation7 + $0x70] sm:$0xf] %v760
    %825 = vst [vmem:[#allocation7 + $0x74] sm:$0xf] %v761
    %826 = vst [vmem:[#allocation7 + $0x78] sm:$0xf] %v762
    %827 = vst [vmem:[#allocation7 + $0x7c] sm:$0xf] %v763
    %828 = vst [vmem:[#allocation7 + $0x80] sm:$0xf] %v764
    %829 = vst [vmem:[#allocation7 + $0x84] sm:$0xf] %v765
    %830 = vst [vmem:[#allocation7 + $0x88] sm:$0xf] %v766
    %831 = vst [vmem:[#allocation7 + $0x8c] sm:$0xf] %v767
    %832 = vst [vmem:[#allocation7 + $0x90] sm:$0xf] %v768
    %833 = vst [vmem:[#allocation7 + $0x94] sm:$0xf] %v769
    %834 = vst [vmem:[#allocation7 + $0x98] sm:$0xf] %v770
    %835 = vst [vmem:[#allocation7 + $0x9c] sm:$0xf] %v771
    %836 = vst [vmem:[#allocation7 + $0xa0] sm:$0xf] %v772
    %837 = vst [vmem:[#allocation7 + $0xa4] sm:$0xf] %v773
    %838 = vst [vmem:[#allocation7 + $0xa8] sm:$0xf] %v774
    %839 = vst [vmem:[#allocation7 + $0xac] sm:$0xf] %v775
    %840 = vst [vmem:[#allocation7 + $0xb0] sm:$0xf] %v776
    %841 = vst [vmem:[#allocation7 + $0xb4] sm:$0xf] %v777
    %842 = vst [vmem:[#allocation7 + $0xb8] sm:$0xf] %v778
    %843 = vst [vmem:[#allocation7 + $0xbc] sm:$0xf] %v779
    %844 = vst [vmem:[#allocation7 + $0xc0] sm:$0xf] %v780
    %845 = vst [vmem:[#allocation7 + $0xc4] sm:$0xf] %v781
    %846 = vst [vmem:[#allocation7 + $0xc8] sm:$0xf] %v782
    %847 = vst [vmem:[#allocation7 + $0xcc] sm:$0xf] %v783
    %848 = vst [vmem:[#allocation7 + $0xd0] sm:$0xf] %v784
    %849 = vst [vmem:[#allocation7 + $0xd4] sm:$0xf] %v785
    %850 = vst [vmem:[#allocation7 + $0xd8] sm:$0xf] %v786
    %851 = vst [vmem:[#allocation7 + $0xdc] sm:$0xf] %v787
    %852 = vst [vmem:[#allocation7 + $0xe0] sm:$0xf] %v788
    %853 = vst [vmem:[#allocation7 + $0xe4] sm:$0xf] %v789
    %854 = vst [vmem:[#allocation7 + $0xe8] sm:$0xf] %v790
    %855 = vst [vmem:[#allocation7 + $0xec] sm:$0xf] %v791
    %856 = vst [vmem:[#allocation7 + $0xf0] sm:$0xf] %v792
    %857 = vst [vmem:[#allocation7 + $0xf4] sm:$0xf] %v793
    %858 = vst [vmem:[#allocation7 + $0xf8] sm:$0xf] %v794
    %859 = vst [vmem:[#allocation7 + $0xfc] sm:$0xf] %v795
    // Predicated region
    $region22: #{tpu_custom_call.1} parent=1 // pred_check
      _
    $region23: #{tpu_custom_call.1} parent=1 // pred_check_branch
      %861 = sbr.rel (0) target = $region25
    $region24: #{tpu_custom_call.1} parent=1 // pred_region
      %863 = vsyncadd [#allocation4], 0
      %s864 = sshll.u32 [#allocation7], 4
      %s865 = int_to_ptr.vmem [resolvable:$true] %s864
      %s866 = sshll.u32 %s3, 4
      %s867 = int_to_ptr.hbm [resolvable:$true] %s866
      %872 = dma.vmem_to_hbm [thread:$0]  %s865, 4096, %s867, [#allocation4], 64, 64, 4
    $region25: #{tpu_custom_call.1} parent=1 // pred_fallthru
      _
    // Predicated region
    $region26: #{tpu_custom_call.1} parent=1 // pred_check
      _
    $region27: #{tpu_custom_call.1} parent=1 // pred_check_branch
      %874 = sbr.rel (0) target = $region29
    $region28: #{tpu_custom_call.1} parent=1 // pred_region
      %876 = dma.done [#allocation4], 4096
    $region29: #{tpu_custom_call.1} parent=1 // pred_fallthru
      _
    %877 = vsyncpa [#allocation3], 1
    %878 = vsyncpa [#allocation6], 1
    %879 = vsyncpa [#allocation4], 1

</llo_original>
